<compile_context>
chip_gen: v5e
topology: v5e:2x2
jax: 0.10.0
libtpu: 0.0.40
codegen_flags: <defaults>
</compile_context>

<pallas_src>
import jax
import jax.numpy as jnp
from jax.experimental import pallas as pl
from jax.experimental.pallas import tpu as pltpu


C_IN = 68
C_OUT = 1632


def _conv1x1_kernel(x_ref, w_ref, b_ref, o_ref):
    # x_ref: (M, C_in)       f32  (cast to bf16 in-kernel for the MXU)
    # w_ref: (C_in, C_out)   bf16 (prepared once at weight-load time)
    # b_ref: (1, C_out)      f32
    # o_ref: (M, C_out)      f32
    x_bf16 = x_ref[...].astype(jnp.bfloat16)
    acc = jnp.dot(x_bf16, w_ref[...], preferred_element_type=jnp.float32)
    o_ref[...] = acc + b_ref[...]


def prepare_params(weight, bias):
    """One-time parameter preparation (weight-load time, not per call).

    weight: (C_out, C_in, 1, 1) f32 (PyTorch layout)
    bias:   (C_out,) f32
    returns (w_mat bf16 (C_in, C_out), b_row f32 (1, C_out))
    """
    c_out, c_in = weight.shape[0], weight.shape[1]
    w_mat = jnp.transpose(weight.reshape(c_out, c_in), (1, 0))  # (C_in, C_out)
    b_row = bias.reshape(1, c_out)
    return w_mat.astype(jnp.bfloat16), b_row.astype(jnp.float32)


def conv2d_1x1(x_nchw, w_mat_bf16, b_row_f32):
    """1x1 conv (stride 1) forward with pre-prepared params.

    x_nchw: (N, C_in, 1, 1) f32
    returns (N, C_out, 1, 1) f32
    """
    N, c_in, H, W = x_nchw.shape
    assert H == 1 and W == 1
    M = N  # H = W = 1

    # Pure bitcast: (N, C_in, 1, 1) -> (N, C_in). No dtype cast here — that
    # happens inside the kernel so there is no extra XLA fusion/dispatch.
    x_rows = x_nchw.reshape(M, c_in)

    bytes_accessed = (
        M * c_in * 4                 # x (f32)
        + c_in * C_OUT * 2           # weight (bf16)
        + C_OUT * 4                  # bias (f32)
        + M * C_OUT * 4              # output (f32)
    )
    vmem = pl.BlockSpec(memory_space=pltpu.MemorySpace.VMEM)
    out_rows = pl.pallas_call(
        _conv1x1_kernel,
        out_shape=jax.ShapeDtypeStruct((M, C_OUT), jnp.float32),
        in_specs=[vmem, vmem, vmem],
        out_specs=vmem,
        cost_estimate=pl.CostEstimate(
            flops=2 * M * c_in * C_OUT,
            bytes_accessed=bytes_accessed,
            transcendentals=0,
        ),
    )(x_rows, w_mat_bf16, b_row_f32)

    # Bitcast back to NCHW (H = W = 1); fuses with the custom-call output.
    return out_rows.reshape(N, C_OUT, 1, 1)


# jit the wrapper so the bitcast reshapes fuse around the single custom call.
conv2d_1x1_jit = jax.jit(conv2d_1x1)


if __name__ == "__main__":
    key = jax.random.PRNGKey(0)
    k_x, k_w, k_b = jax.random.split(key, 3)

    N, H, W = 1, 1, 1

    # Deterministic synthetic parameters (shapes match nn.Conv2d(68, 1632, 1)).
    x = jax.random.normal(k_x, (N, C_IN, H, W), dtype=jnp.float32)
    weight = jax.random.normal(k_w, (C_OUT, C_IN, 1, 1), dtype=jnp.float32) * 0.05
    bias = jax.random.normal(k_b, (C_OUT,), dtype=jnp.float32) * 0.05

    # One-time prep (hoisted out of the per-call path).
    w_mat_bf16, b_row_f32 = prepare_params(weight, bias)
    w_mat_bf16 = jax.block_until_ready(w_mat_bf16)
    b_row_f32 = jax.block_until_ready(b_row_f32)

    out = conv2d_1x1_jit(x, w_mat_bf16, b_row_f32)
    out = jax.block_until_ready(out)

    # Reference check in plain JAX (f32 math).
    ref = (x.reshape(N, C_IN) @ weight.reshape(C_OUT, C_IN).T + bias).reshape(
        N, C_OUT, H, W)
    assert out.shape == (N, C_OUT, H, W)
    # bf16 weights/activation inside the dot -> loosened tolerance vs f32 ref.
    assert jnp.allclose(out, ref, atol=3e-2, rtol=3e-2)

    print("KERNEL_OK")
</pallas_src>

<mosaic_0001>
module attributes {stable_mosaic.version = 11 : i64} {
  func.func @_conv1x1_kernel(%arg0: memref<1x68xf32, #tpu.memory_space<vmem>>, %arg1: memref<68x1632xbf16, #tpu.memory_space<vmem>>, %arg2: memref<1x1632xf32, #tpu.memory_space<vmem>>, %arg3: memref<1x1632xf32, #tpu.memory_space<vmem>>) attributes {dimension_semantics = [], scalar_prefetch = 0 : i64, scratch_operands = 0 : i64, tpu.core_type = #tpu.core_type<tc>} {
    %c0 = arith.constant 0 : index
    %c0_0 = arith.constant 0 : index
    %0 = vector.load %arg0[%c0, %c0_0] : memref<1x68xf32, #tpu.memory_space<vmem>>, vector<1x68xf32>
    %1 = arith.truncf %0 : vector<1x68xf32> to vector<1x68xbf16>
    %c0_1 = arith.constant 0 : index
    %c0_2 = arith.constant 0 : index
    %2 = vector.load %arg1[%c0_1, %c0_2] : memref<68x1632xbf16, #tpu.memory_space<vmem>>, vector<68x1632xbf16>
    %cst = arith.constant dense<0.000000e+00> : vector<1x1632xf32>
    %3 = tpu.matmul %1, %2, %cst {dimension_numbers = #tpu.dot_dimension_numbers<[1], [0], [0], [1], [0, 0, 1, 1], [], []>} : vector<1x68xbf16>, vector<68x1632xbf16>, vector<1x1632xf32> -> vector<1x1632xf32>
    %c0_3 = arith.constant 0 : index
    %c0_4 = arith.constant 0 : index
    %4 = vector.load %arg2[%c0_3, %c0_4] : memref<1x1632xf32, #tpu.memory_space<vmem>>, vector<1x1632xf32>
    %5 = arith.addf %3, %4 : vector<1x1632xf32>
    %c0_5 = arith.constant 0 : index
    %c0_6 = arith.constant 0 : index
    %6 = vector.load %arg3[%c0_5, %c0_6] : memref<1x1632xf32, #tpu.memory_space<vmem>>, vector<1x1632xf32>
    tpu.vector_store %arg3[%c0_5, %c0_6], %5 {strides = array<i32>} : memref<1x1632xf32, #tpu.memory_space<vmem>>, vector<1x1632xf32>,
    return
  }
}

</mosaic_0001>

<llo_original>
// kernel: conv2d_1x1.1
$region0: #{conv2d_1x1.1}
  #allocation0 [shape = 'u32[]', space=smem, size = 0x4, offset = 0x4, fixed_abs, tag = 'smem constant byte address 0x4 - core index']
  #allocation1 [shape = 'u32[72,128]{1,0:T(1,128)}', space=vmem, size = 0x9000, scoped, tag = 'internal scratch']
  %s0 = inlined_call_operand.hbm [shape: f32[1,68], index: 0, kind: input, shape index: {}]
  %s1 = inlined_call_operand.hbm [shape: bf16[68,1632], index: 1, kind: input, shape index: {}]
  %s2 = inlined_call_operand.hbm [shape: f32[1,1632], index: 2, kind: input, shape index: {}]
  %s3 = inlined_call_operand.hbm [shape: f32[1,1632], index: 3, kind: output, shape index: {}]
  %s4 = sld [smem:[#allocation0]]
  $region34: #{conv2d_1x1.1} parent=0
    _
  %s6 = ssub.s32 1, %s4
  %s7 = scalar_select 0, %s6, %s4
  $region1: #{conv2d_1x1.1} parent=0
    #allocation2 [shape = 'u8[512]{0}', space=vmem, size = 0x400, scoped, tag = 'input window, operand 0, single buffered']
    #allocation3 [shape = 's32[1]{0}', space=sflag, size = 0x4, scoped, tag = 'scoped memory for conv2d_1x1.1']
    #allocation4 [shape = 's32[1]{0}', space=sflag, size = 0x4, scoped, tag = 'scoped memory for conv2d_1x1.1']
    #allocation5 [shape = 'u8[239616]{0}', space=vmem, size = 0x3a800, scoped, tag = 'input window, operand 1, single buffered']
    #allocation6 [shape = 's32[1]{0}', space=sflag, size = 0x4, scoped, tag = 'scoped memory for conv2d_1x1.1']
    #allocation7 [shape = 'u8[6656]{0}', space=vmem, size = 0x1c00, scoped, tag = 'input window, operand 2, single buffered']
    #allocation8 [shape = 'u8[6656]{0}', space=vmem, size = 0x1c00, scoped, tag = 'output window, operand 0, single buffered']
    %8 = vsyncpa [#allocation3], 0
    %9 = vsyncpa [#allocation6], 0
    %10 = vsyncpa [#allocation4], 0
    // Predicated region
    $region2: #{conv2d_1x1.1} parent=1 // pred_check
      _
    $region3: #{conv2d_1x1.1} parent=1 // pred_check_branch
      %12 = sbr.rel (0) target = $region5
    $region4: #{conv2d_1x1.1} parent=1 // pred_region
      %14 = vsyncadd [#allocation3], 0
      %s16 = sshll.u32 %s0, 4
      %s17 = int_to_ptr.hbm [resolvable:$true] %s16
      %s18 = sshll.u32 [#allocation2], 4
      %s19 = int_to_ptr.vmem [resolvable:$true] %s18
      %21 = dma.hbm_to_vmem [thread:$0]  %s17, 16, %s19, [#allocation3]
    $region5: #{conv2d_1x1.1} parent=1 // pred_fallthru
      _
    // Predicated region
    $region6: #{conv2d_1x1.1} parent=1 // pred_check
      _
    $region7: #{conv2d_1x1.1} parent=1 // pred_check_branch
      %23 = sbr.rel (0) target = $region9
    $region8: #{conv2d_1x1.1} parent=1 // pred_region
      %25 = vsyncadd [#allocation6], 0
      %s26 = sshll.u32 %s1, 4
      %s27 = int_to_ptr.hbm [resolvable:$true] %s26
      %s28 = sshll.u32 [#allocation5], 4
      %s29 = int_to_ptr.vmem [resolvable:$true] %s28
      %34 = dma.hbm_to_vmem [thread:$0]  %s27, 7488, %s29, [#allocation6], 832, 832, 52
    $region9: #{conv2d_1x1.1} parent=1 // pred_fallthru
      _
    // Predicated region
    $region10: #{conv2d_1x1.1} parent=1 // pred_check
      _
    $region11: #{conv2d_1x1.1} parent=1 // pred_check_branch
      %36 = sbr.rel (0) target = $region13
    $region12: #{conv2d_1x1.1} parent=1 // pred_region
      %38 = vsyncadd [#allocation6], 0
      %s40 = sshll.u32 %s2, 4
      %s41 = int_to_ptr.hbm [resolvable:$true] %s40
      %s42 = sshll.u32 [#allocation7], 4
      %s43 = int_to_ptr.vmem [resolvable:$true] %s42
      %45 = dma.hbm_to_vmem [thread:$0]  %s41, 208, %s43, [#allocation6]
    $region13: #{conv2d_1x1.1} parent=1 // pred_fallthru
      _
    // Predicated region
    $region14: #{conv2d_1x1.1} parent=1 // pred_check
      _
    $region15: #{conv2d_1x1.1} parent=1 // pred_check_branch
      %47 = sbr.rel (0) target = $region17
    $region16: #{conv2d_1x1.1} parent=1 // pred_region
      %49 = dma.done [#allocation3], 16
    $region17: #{conv2d_1x1.1} parent=1 // pred_fallthru
      _
    // Predicated region
    $region18: #{conv2d_1x1.1} parent=1 // pred_check
      _
    $region19: #{conv2d_1x1.1} parent=1 // pred_check_branch
      %51 = sbr.rel (0) target = $region21
    $region20: #{conv2d_1x1.1} parent=1 // pred_region
      %53 = dma.done [#allocation6], 7488
    $region21: #{conv2d_1x1.1} parent=1 // pred_fallthru
      _
    // Predicated region
    $region22: #{conv2d_1x1.1} parent=1 // pred_check
      _
    $region23: #{conv2d_1x1.1} parent=1 // pred_check_branch
      %55 = sbr.rel (0) target = $region25
    $region24: #{conv2d_1x1.1} parent=1 // pred_region
      %57 = dma.done [#allocation6], 208
    $region25: #{conv2d_1x1.1} parent=1 // pred_fallthru
      _
    %v59 = vld [vmem:[#allocation2] sm:$0x1]
    %v60 = vpack.c.bf16 %v59, %v59
    %v61 = vld [vmem:[#allocation5] sm:$0xff]
    %v62 = vld [vmem:[#allocation5 + $0x8] sm:$0xff]
    %v63 = vld [vmem:[#allocation5 + $0x10] sm:$0xff]
    %v64 = vld [vmem:[#allocation5 + $0x18] sm:$0xff]
    %v65 = vld [vmem:[#allocation5 + $0x20] sm:$0xff]
    %v66 = vld [vmem:[#allocation5 + $0x28] sm:$0xff]
    %v67 = vld [vmem:[#allocation5 + $0x30] sm:$0xf]
    %v68 = vld [vmem:[#allocation5 + $0x34] sm:$0xff]
    %v69 = vld [vmem:[#allocation5 + $0x3c] sm:$0xff]
    %v70 = vld [vmem:[#allocation5 + $0x44] sm:$0xff]
    %v71 = vld [vmem:[#allocation5 + $0x4c] sm:$0xff]
    %v72 = vld [vmem:[#allocation5 + $0x54] sm:$0xff]
    %v73 = vld [vmem:[#allocation5 + $0x5c] sm:$0xff]
    %v74 = vld [vmem:[#allocation5 + $0x64] sm:$0xf]
    %v75 = vld [vmem:[#allocation5 + $0x68] sm:$0xff]
    %v76 = vld [vmem:[#allocation5 + $0x70] sm:$0xff]
    %v77 = vld [vmem:[#allocation5 + $0x78] sm:$0xff]
    %v78 = vld [vmem:[#allocation5 + $0x80] sm:$0xff]
    %v79 = vld [vmem:[#allocation5 + $0x88] sm:$0xff]
    %v80 = vld [vmem:[#allocation5 + $0x90] sm:$0xff]
    %v81 = vld [vmem:[#allocation5 + $0x98] sm:$0xf]
    %v82 = vld [vmem:[#allocation5 + $0x9c] sm:$0xff]
    %v83 = vld [vmem:[#allocation5 + $0xa4] sm:$0xff]
    %v84 = vld [vmem:[#allocation5 + $0xac] sm:$0xff]
    %v85 = vld [vmem:[#allocation5 + $0xb4] sm:$0xff]
    %v86 = vld [vmem:[#allocation5 + $0xbc] sm:$0xff]
    %v87 = vld [vmem:[#allocation5 + $0xc4] sm:$0xff]
    %v88 = vld [vmem:[#allocation5 + $0xcc] sm:$0xf]
    %v89 = vld [vmem:[#allocation5 + $0xd0] sm:$0xff]
    %v90 = vld [vmem:[#allocation5 + $0xd8] sm:$0xff]
    %v91 = vld [vmem:[#allocation5 + $0xe0] sm:$0xff]
    %v92 = vld [vmem:[#allocation5 + $0xe8] sm:$0xff]
    %v93 = vld [vmem:[#allocation5 + $0xf0] sm:$0xff]
    %v94 = vld [vmem:[#allocation5 + $0xf8] sm:$0xff]
    %v95 = vld [vmem:[#allocation5 + $0x100] sm:$0xf]
    %v96 = vld [vmem:[#allocation5 + $0x104] sm:$0xff]
    %v97 = vld [vmem:[#allocation5 + $0x10c] sm:$0xff]
    %v98 = vld [vmem:[#allocation5 + $0x114] sm:$0xff]
    %v99 = vld [vmem:[#allocation5 + $0x11c] sm:$0xff]
    %v100 = vld [vmem:[#allocation5 + $0x124] sm:$0xff]
    %v101 = vld [vmem:[#allocation5 + $0x12c] sm:$0xff]
    %v102 = vld [vmem:[#allocation5 + $0x134] sm:$0xf]
    %v103 = vld [vmem:[#allocation5 + $0x138] sm:$0xff]
    %v104 = vld [vmem:[#allocation5 + $0x140] sm:$0xff]
    %v105 = vld [vmem:[#allocation5 + $0x148] sm:$0xff]
    %v106 = vld [vmem:[#allocation5 + $0x150] sm:$0xff]
    %v107 = vld [vmem:[#allocation5 + $0x158] sm:$0xff]
    %v108 = vld [vmem:[#allocation5 + $0x160] sm:$0xff]
    %v109 = vld [vmem:[#allocation5 + $0x168] sm:$0xf]
    %v110 = vld [vmem:[#allocation5 + $0x16c] sm:$0xff]
    %v111 = vld [vmem:[#allocation5 + $0x174] sm:$0xff]
    %v112 = vld [vmem:[#allocation5 + $0x17c] sm:$0xff]
    %v113 = vld [vmem:[#allocation5 + $0x184] sm:$0xff]
    %v114 = vld [vmem:[#allocation5 + $0x18c] sm:$0xff]
    %v115 = vld [vmem:[#allocation5 + $0x194] sm:$0xff]
    %v116 = vld [vmem:[#allocation5 + $0x19c] sm:$0xf]
    %v117 = vld [vmem:[#allocation5 + $0x1a0] sm:$0x33]
    %v118 = vld [vmem:[#allocation5 + $0x1a8] sm:$0x33]
    %v119 = vld [vmem:[#allocation5 + $0x1b0] sm:$0x33]
    %v120 = vld [vmem:[#allocation5 + $0x1b8] sm:$0x33]
    %v121 = vld [vmem:[#allocation5 + $0x1c0] sm:$0x33]
    %v122 = vld [vmem:[#allocation5 + $0x1c8] sm:$0x33]
    %v123 = vld [vmem:[#allocation5 + $0x1d0] sm:$0x3]
    %v124 = vld [vmem:[#allocation7] sm:$0xff]
    %v125 = vld [vmem:[#allocation7 + $0x8] sm:$0x1f]
    %v189 = vunpack.c.l.b16 %v61
    %v190 = vunpack.c.h.b16 %v61
    %v191 = vunpack.c.l.b16 %v62
    %v192 = vunpack.c.h.b16 %v62
    %v193 = vunpack.c.l.b16 %v63
    %v194 = vunpack.c.h.b16 %v63
    %v195 = vunpack.c.l.b16 %v64
    %v196 = vunpack.c.h.b16 %v64
    %v197 = vunpack.c.l.b16 %v65
    %v198 = vunpack.c.h.b16 %v65
    %v199 = vunpack.c.l.b16 %v66
    %v200 = vunpack.c.h.b16 %v66
    %v201 = vunpack.c.l.b16 %v67
    %v202 = vunpack.c.l.b16 %v68
    %v203 = vunpack.c.h.b16 %v68
    %v204 = vunpack.c.l.b16 %v69
    %v205 = vunpack.c.h.b16 %v69
    %v206 = vunpack.c.l.b16 %v70
    %v207 = vunpack.c.h.b16 %v70
    %v208 = vunpack.c.l.b16 %v71
    %v209 = vunpack.c.h.b16 %v71
    %v210 = vunpack.c.l.b16 %v72
    %v211 = vunpack.c.h.b16 %v72
    %v212 = vunpack.c.l.b16 %v73
    %v213 = vunpack.c.h.b16 %v73
    %v214 = vunpack.c.l.b16 %v74
    %v215 = vunpack.c.l.b16 %v75
    %v216 = vunpack.c.h.b16 %v75
    %v217 = vunpack.c.l.b16 %v76
    %v218 = vunpack.c.h.b16 %v76
    %v219 = vunpack.c.l.b16 %v77
    %v220 = vunpack.c.h.b16 %v77
    %v221 = vunpack.c.l.b16 %v78
    %v222 = vunpack.c.h.b16 %v78
    %v223 = vunpack.c.l.b16 %v79
    %v224 = vunpack.c.h.b16 %v79
    %v225 = vunpack.c.l.b16 %v80
    %v226 = vunpack.c.h.b16 %v80
    %v227 = vunpack.c.l.b16 %v81
    %v228 = vunpack.c.l.b16 %v82
    %v229 = vunpack.c.h.b16 %v82
    %v230 = vunpack.c.l.b16 %v83
    %v231 = vunpack.c.h.b16 %v83
    %v232 = vunpack.c.l.b16 %v84
    %v233 = vunpack.c.h.b16 %v84
    %v234 = vunpack.c.l.b16 %v85
    %v235 = vunpack.c.h.b16 %v85
    %v236 = vunpack.c.l.b16 %v86
    %v237 = vunpack.c.h.b16 %v86
    %v238 = vunpack.c.l.b16 %v87
    %v239 = vunpack.c.h.b16 %v87
    %v240 = vunpack.c.l.b16 %v88
    %v241 = vunpack.c.l.b16 %v89
    %v242 = vunpack.c.h.b16 %v89
    %v243 = vunpack.c.l.b16 %v90
    %v244 = vunpack.c.h.b16 %v90
    %v245 = vunpack.c.l.b16 %v91
    %v246 = vunpack.c.h.b16 %v91
    %v247 = vunpack.c.l.b16 %v92
    %v248 = vunpack.c.h.b16 %v92
    %v249 = vunpack.c.l.b16 %v93
    %v250 = vunpack.c.h.b16 %v93
    %v251 = vunpack.c.l.b16 %v94
    %v252 = vunpack.c.h.b16 %v94
    %v253 = vunpack.c.l.b16 %v95
    %v254 = vunpack.c.l.b16 %v96
    %v255 = vunpack.c.h.b16 %v96
    %v256 = vunpack.c.l.b16 %v97
    %v257 = vunpack.c.h.b16 %v97
    %v258 = vunpack.c.l.b16 %v98
    %v259 = vunpack.c.h.b16 %v98
    %v260 = vunpack.c.l.b16 %v99
    %v261 = vunpack.c.h.b16 %v99
    %v262 = vunpack.c.l.b16 %v100
    %v263 = vunpack.c.h.b16 %v100
    %v264 = vunpack.c.l.b16 %v101
    %v265 = vunpack.c.h.b16 %v101
    %v266 = vunpack.c.l.b16 %v102
    %v267 = vunpack.c.l.b16 %v103
    %v268 = vunpack.c.h.b16 %v103
    %v269 = vunpack.c.l.b16 %v104
    %v270 = vunpack.c.h.b16 %v104
    %v271 = vunpack.c.l.b16 %v105
    %v272 = vunpack.c.h.b16 %v105
    %v273 = vunpack.c.l.b16 %v106
    %v274 = vunpack.c.h.b16 %v106
    %v275 = vunpack.c.l.b16 %v107
    %v276 = vunpack.c.h.b16 %v107
    %v277 = vunpack.c.l.b16 %v108
    %v278 = vunpack.c.h.b16 %v108
    %v279 = vunpack.c.l.b16 %v109
    %v280 = vunpack.c.l.b16 %v110
    %v281 = vunpack.c.h.b16 %v110
    %v282 = vunpack.c.l.b16 %v111
    %v283 = vunpack.c.h.b16 %v111
    %v284 = vunpack.c.l.b16 %v112
    %v285 = vunpack.c.h.b16 %v112
    %v286 = vunpack.c.l.b16 %v113
    %v287 = vunpack.c.h.b16 %v113
    %v288 = vunpack.c.l.b16 %v114
    %v289 = vunpack.c.h.b16 %v114
    %v290 = vunpack.c.l.b16 %v115
    %v291 = vunpack.c.h.b16 %v115
    %v292 = vunpack.c.l.b16 %v116
    %v293 = vunpack.c.l.b16 %v117
    %v294 = vunpack.c.h.b16 %v117
    %v295 = vunpack.c.l.b16 %v118
    %v296 = vunpack.c.h.b16 %v118
    %v297 = vunpack.c.l.b16 %v119
    %v298 = vunpack.c.h.b16 %v119
    %v299 = vunpack.c.l.b16 %v120
    %v300 = vunpack.c.h.b16 %v120
    %v301 = vunpack.c.l.b16 %v121
    %v302 = vunpack.c.h.b16 %v121
    %v303 = vunpack.c.l.b16 %v122
    %v304 = vunpack.c.h.b16 %v122
    %v305 = vunpack.c.l.b16 %v123
    %v306 = vpack.c.b16 %v202, %v189
    %v307 = vpack.c.b16 %v203, %v190
    %v308 = vpack.c.b16 %v204, %v191
    %v309 = vpack.c.b16 %v205, %v192
    %v310 = vpack.c.b16 %v206, %v193
    %v311 = vpack.c.b16 %v207, %v194
    %v312 = vpack.c.b16 %v208, %v195
    %v313 = vpack.c.b16 %v209, %v196
    %v314 = vpack.c.b16 %v210, %v197
    %v315 = vpack.c.b16 %v211, %v198
    %v316 = vpack.c.b16 %v212, %v199
    %v317 = vpack.c.b16 %v213, %v200
    %v318 = vpack.c.b16 %v214, %v201
    %v319 = vpack.c.b16 %v228, %v215
    %v320 = vpack.c.b16 %v229, %v216
    %v321 = vpack.c.b16 %v230, %v217
    %v322 = vpack.c.b16 %v231, %v218
    %v323 = vpack.c.b16 %v232, %v219
    %v324 = vpack.c.b16 %v233, %v220
    %v325 = vpack.c.b16 %v234, %v221
    %v326 = vpack.c.b16 %v235, %v222
    %v327 = vpack.c.b16 %v236, %v223
    %v328 = vpack.c.b16 %v237, %v224
    %v329 = vpack.c.b16 %v238, %v225
    %v330 = vpack.c.b16 %v239, %v226
    %v331 = vpack.c.b16 %v240, %v227
    %v332 = vpack.c.b16 %v254, %v241
    %v333 = vpack.c.b16 %v255, %v242
    %v334 = vpack.c.b16 %v256, %v243
    %v335 = vpack.c.b16 %v257, %v244
    %v336 = vpack.c.b16 %v258, %v245
    %v337 = vpack.c.b16 %v259, %v246
    %v338 = vpack.c.b16 %v260, %v247
    %v339 = vpack.c.b16 %v261, %v248
    %v340 = vpack.c.b16 %v262, %v249
    %v341 = vpack.c.b16 %v263, %v250
    %v342 = vpack.c.b16 %v264, %v251
    %v343 = vpack.c.b16 %v265, %v252
    %v344 = vpack.c.b16 %v266, %v253
    %v345 = vpack.c.b16 %v280, %v267
    %v346 = vpack.c.b16 %v281, %v268
    %v347 = vpack.c.b16 %v282, %v269
    %v348 = vpack.c.b16 %v283, %v270
    %v349 = vpack.c.b16 %v284, %v271
    %v350 = vpack.c.b16 %v285, %v272
    %v351 = vpack.c.b16 %v286, %v273
    %v352 = vpack.c.b16 %v287, %v274
    %v353 = vpack.c.b16 %v288, %v275
    %v354 = vpack.c.b16 %v289, %v276
    %v355 = vpack.c.b16 %v290, %v277
    %v356 = vpack.c.b16 %v291, %v278
    %v357 = vpack.c.b16 %v292, %v279
    %v358 = vpack.c.b16 %v293, %v293
    %v359 = vpack.c.b16 %v294, %v294
    %v360 = vpack.c.b16 %v295, %v295
    %v361 = vpack.c.b16 %v296, %v296
    %v362 = vpack.c.b16 %v297, %v297
    %v363 = vpack.c.b16 %v298, %v298
    %v364 = vpack.c.b16 %v299, %v299
    %v365 = vpack.c.b16 %v300, %v300
    %v366 = vpack.c.b16 %v301, %v301
    %v367 = vpack.c.b16 %v302, %v302
    %v368 = vpack.c.b16 %v303, %v303
    %v369 = vpack.c.b16 %v304, %v304
    %v370 = vpack.c.b16 %v305, %v305
    %v425 = vperm.slane %v124, 0
    %v426 = vperm.slane %v124, 1
    %v427 = vperm.slane %v124, 2
    %v428 = vperm.slane %v124, 3
    %v429 = vperm.slane %v124, 4
    %v430 = vperm.slane %v124, 5
    %v431 = vperm.slane %v124, 6
    %v432 = vperm.slane %v124, 7
    %v433 = vperm.slane %v125, 0
    %v434 = vperm.slane %v125, 1
    %v435 = vperm.slane %v125, 2
    %v436 = vperm.slane %v125, 3
    %v437 = vperm.slane %v125, 4
    %vm451 = vcmask 556032
    %v453 = vsel %vm451, %v60, 0
    %vm455 = vcmask 1041408
    %v457 = vsel %vm455, %v358, 0
    %v460 = vsel %vm455, %v359, 0
    %v463 = vsel %vm455, %v360, 0
    %v466 = vsel %vm455, %v361, 0
    %v469 = vsel %vm455, %v362, 0
    %v472 = vsel %vm455, %v363, 0
    %v475 = vsel %vm455, %v364, 0
    %v478 = vsel %vm455, %v365, 0
    %v481 = vsel %vm455, %v366, 0
    %v484 = vsel %vm455, %v367, 0
    %v487 = vsel %vm455, %v368, 0
    %v490 = vsel %vm455, %v369, 0
    %v493 = vsel %vm455, %v370, 0
    %495 = vmatpush.bf16.msra.mxu0 0
    %496 = vmatpush.bf16.msra.mxu0 0
    %497 = vmatpush.bf16.msra.mxu0 0
    %498 = vmatpush.bf16.msra.mxu0 %v457
    %499 = vmatpush.bf16.msra.mxu0 %v345
    %500 = vmatpush.bf16.msra.mxu0 %v332
    %501 = vmatpush.bf16.msra.mxu0 %v319
    %502 = vmatpush.bf16.msra.mxu0 %v306
    %503 = vmatmul.bf16.gmra.mxu0 %v453
    %v504 = vpop.f32.mrf.mxu0
    %v505 = vadd.f32 %v425, %v504
    %v506 = vpop.f32.mrf.mxu0
    %507 = vdwg.mxu0
    %508 = vmatpush.bf16.msra.mxu0 0
    %509 = vmatpush.bf16.msra.mxu0 0
    %510 = vmatpush.bf16.msra.mxu0 0
    %511 = vmatpush.bf16.msra.mxu0 %v460
    %512 = vmatpush.bf16.msra.mxu0 %v346
    %513 = vmatpush.bf16.msra.mxu0 %v333
    %514 = vmatpush.bf16.msra.mxu0 %v320
    %515 = vmatpush.bf16.msra.mxu0 %v307
    %516 = vmatmul.bf16.gmra.mxu0 %v453
    %v517 = vpop.f32.mrf.mxu0
    %v518 = vadd.f32 %v426, %v517
    %v519 = vpop.f32.mrf.mxu0
    %520 = vdwg.mxu0
    %521 = vmatpush.bf16.msra.mxu0 0
    %522 = vmatpush.bf16.msra.mxu0 0
    %523 = vmatpush.bf16.msra.mxu0 0
    %524 = vmatpush.bf16.msra.mxu0 %v463
    %525 = vmatpush.bf16.msra.mxu0 %v347
    %526 = vmatpush.bf16.msra.mxu0 %v334
    %527 = vmatpush.bf16.msra.mxu0 %v321
    %528 = vmatpush.bf16.msra.mxu0 %v308
    %529 = vmatmul.bf16.gmra.mxu0 %v453
    %v530 = vpop.f32.mrf.mxu0
    %v531 = vadd.f32 %v427, %v530
    %v532 = vpop.f32.mrf.mxu0
    %533 = vdwg.mxu0
    %534 = vmatpush.bf16.msra.mxu0 0
    %535 = vmatpush.bf16.msra.mxu0 0
    %536 = vmatpush.bf16.msra.mxu0 0
    %537 = vmatpush.bf16.msra.mxu0 %v466
    %538 = vmatpush.bf16.msra.mxu0 %v348
    %539 = vmatpush.bf16.msra.mxu0 %v335
    %540 = vmatpush.bf16.msra.mxu0 %v322
    %541 = vmatpush.bf16.msra.mxu0 %v309
    %542 = vmatmul.bf16.gmra.mxu0 %v453
    %v543 = vpop.f32.mrf.mxu0
    %v544 = vadd.f32 %v428, %v543
    %v545 = vpop.f32.mrf.mxu0
    %546 = vdwg.mxu0
    %547 = vmatpush.bf16.msra.mxu0 0
    %548 = vmatpush.bf16.msra.mxu0 0
    %549 = vmatpush.bf16.msra.mxu0 0
    %550 = vmatpush.bf16.msra.mxu0 %v469
    %551 = vmatpush.bf16.msra.mxu0 %v349
    %552 = vmatpush.bf16.msra.mxu0 %v336
    %553 = vmatpush.bf16.msra.mxu0 %v323
    %554 = vmatpush.bf16.msra.mxu0 %v310
    %555 = vmatmul.bf16.gmra.mxu0 %v453
    %v556 = vpop.f32.mrf.mxu0
    %v557 = vadd.f32 %v429, %v556
    %v558 = vpop.f32.mrf.mxu0
    %559 = vdwg.mxu0
    %560 = vmatpush.bf16.msra.mxu0 0
    %561 = vmatpush.bf16.msra.mxu0 0
    %562 = vmatpush.bf16.msra.mxu0 0
    %563 = vmatpush.bf16.msra.mxu0 %v472
    %564 = vmatpush.bf16.msra.mxu0 %v350
    %565 = vmatpush.bf16.msra.mxu0 %v337
    %566 = vmatpush.bf16.msra.mxu0 %v324
    %567 = vmatpush.bf16.msra.mxu0 %v311
    %568 = vmatmul.bf16.gmra.mxu0 %v453
    %v569 = vpop.f32.mrf.mxu0
    %v570 = vadd.f32 %v430, %v569
    %v571 = vpop.f32.mrf.mxu0
    %572 = vdwg.mxu0
    %573 = vmatpush.bf16.msra.mxu0 0
    %574 = vmatpush.bf16.msra.mxu0 0
    %575 = vmatpush.bf16.msra.mxu0 0
    %576 = vmatpush.bf16.msra.mxu0 %v475
    %577 = vmatpush.bf16.msra.mxu0 %v351
    %578 = vmatpush.bf16.msra.mxu0 %v338
    %579 = vmatpush.bf16.msra.mxu0 %v325
    %580 = vmatpush.bf16.msra.mxu0 %v312
    %581 = vmatmul.bf16.gmra.mxu0 %v453
    %v582 = vpop.f32.mrf.mxu0
    %v583 = vadd.f32 %v431, %v582
    %v584 = vpop.f32.mrf.mxu0
    %585 = vdwg.mxu0
    %586 = vmatpush.bf16.msra.mxu0 0
    %587 = vmatpush.bf16.msra.mxu0 0
    %588 = vmatpush.bf16.msra.mxu0 0
    %589 = vmatpush.bf16.msra.mxu0 %v478
    %590 = vmatpush.bf16.msra.mxu0 %v352
    %591 = vmatpush.bf16.msra.mxu0 %v339
    %592 = vmatpush.bf16.msra.mxu0 %v326
    %593 = vmatpush.bf16.msra.mxu0 %v313
    %594 = vmatmul.bf16.gmra.mxu0 %v453
    %v595 = vpop.f32.mrf.mxu0
    %v596 = vadd.f32 %v432, %v595
    %v597 = vpop.f32.mrf.mxu0
    %598 = vdwg.mxu0
    %599 = vmatpush.bf16.msra.mxu0 0
    %600 = vmatpush.bf16.msra.mxu0 0
    %601 = vmatpush.bf16.msra.mxu0 0
    %602 = vmatpush.bf16.msra.mxu0 %v481
    %603 = vmatpush.bf16.msra.mxu0 %v353
    %604 = vmatpush.bf16.msra.mxu0 %v340
    %605 = vmatpush.bf16.msra.mxu0 %v327
    %606 = vmatpush.bf16.msra.mxu0 %v314
    %607 = vmatmul.bf16.gmra.mxu0 %v453
    %v608 = vpop.f32.mrf.mxu0
    %v609 = vadd.f32 %v433, %v608
    %v610 = vpop.f32.mrf.mxu0
    %611 = vdwg.mxu0
    %612 = vmatpush.bf16.msra.mxu0 0
    %613 = vmatpush.bf16.msra.mxu0 0
    %614 = vmatpush.bf16.msra.mxu0 0
    %615 = vmatpush.bf16.msra.mxu0 %v484
    %616 = vmatpush.bf16.msra.mxu0 %v354
    %617 = vmatpush.bf16.msra.mxu0 %v341
    %618 = vmatpush.bf16.msra.mxu0 %v328
    %619 = vmatpush.bf16.msra.mxu0 %v315
    %620 = vmatmul.bf16.gmra.mxu0 %v453
    %v621 = vpop.f32.mrf.mxu0
    %v622 = vadd.f32 %v434, %v621
    %v623 = vpop.f32.mrf.mxu0
    %624 = vdwg.mxu0
    %625 = vmatpush.bf16.msra.mxu0 0
    %626 = vmatpush.bf16.msra.mxu0 0
    %627 = vmatpush.bf16.msra.mxu0 0
    %628 = vmatpush.bf16.msra.mxu0 %v487
    %629 = vmatpush.bf16.msra.mxu0 %v355
    %630 = vmatpush.bf16.msra.mxu0 %v342
    %631 = vmatpush.bf16.msra.mxu0 %v329
    %632 = vmatpush.bf16.msra.mxu0 %v316
    %633 = vmatmul.bf16.gmra.mxu0 %v453
    %v634 = vpop.f32.mrf.mxu0
    %v635 = vadd.f32 %v435, %v634
    %v636 = vpop.f32.mrf.mxu0
    %637 = vdwg.mxu0
    %638 = vmatpush.bf16.msra.mxu0 0
    %639 = vmatpush.bf16.msra.mxu0 0
    %640 = vmatpush.bf16.msra.mxu0 0
    %641 = vmatpush.bf16.msra.mxu0 %v490
    %642 = vmatpush.bf16.msra.mxu0 %v356
    %643 = vmatpush.bf16.msra.mxu0 %v343
    %644 = vmatpush.bf16.msra.mxu0 %v330
    %645 = vmatpush.bf16.msra.mxu0 %v317
    %646 = vmatmul.bf16.gmra.mxu0 %v453
    %v647 = vpop.f32.mrf.mxu0
    %v648 = vadd.f32 %v436, %v647
    %v649 = vpop.f32.mrf.mxu0
    %650 = vdwg.mxu0
    %651 = vmatpush.bf16.msra.mxu0 0
    %652 = vmatpush.bf16.msra.mxu0 0
    %653 = vmatpush.bf16.msra.mxu0 0
    %654 = vmatpush.bf16.msra.mxu0 %v493
    %655 = vmatpush.bf16.msra.mxu0 %v357
    %656 = vmatpush.bf16.msra.mxu0 %v344
    %657 = vmatpush.bf16.msra.mxu0 %v331
    %658 = vmatpush.bf16.msra.mxu0 %v318
    %659 = vmatmul.bf16.gmra.mxu0 %v453
    %v660 = vpop.f32.mrf.mxu0
    %v661 = vadd.f32 %v437, %v660
    %v662 = vpop.f32.mrf.mxu0
    %663 = vdwg.mxu0
    %v677 = vrot.slane %v518, 7
    %v678 = vrot.slane %v531, 6
    %v679 = vrot.slane %v544, 5
    %v680 = vrot.slane %v557, 4
    %v681 = vrot.slane %v570, 3
    %v682 = vrot.slane %v583, 2
    %v683 = vrot.slane %v596, 1
    %v684 = vrot.slane %v622, 7
    %v685 = vrot.slane %v635, 6
    %v686 = vrot.slane %v648, 5
    %v687 = vrot.slane %v661, 4
    %vm688 = vcmask 1040384
    %v689 = vsel %vm688, %v505, %v677
    %vm690 = vcmask 1042434
    %v691 = vsel %vm690, %v678, %v679
    %v692 = vsel %vm455, %v689, %v691
    %vm693 = vcmask 1044484
    %v694 = vsel %vm693, %v680, %v681
    %vm695 = vcmask 1046534
    %v696 = vsel %vm695, %v682, %v683
    %vm697 = vcmask 1045508
    %v698 = vsel %vm697, %v694, %v696
    %vm699 = vcmask 1043456
    %v700 = vsel %vm699, %v692, %v698
    %v701 = vsel %vm688, %v609, %v684
    %v702 = vsel %vm455, %v701, %v685
    %vm703 = vcmask 1043459
    %v704 = vsel %vm703, %v686, %v687
    %vm705 = vcmask 1042432
    %v706 = vsel %vm705, %v702, %v704
    %709 = vst [vmem:[#allocation8] sm:$0xff] %v700
    %v710 = vlaneseq
    %vm711 = vcmp.ge.s32.totalorder %v710, 0
    %vm712 = vcmp.lt.s32.totalorder %v710, 608
    %vm713 = vmand %vm711, %vm712
    %714 = vst.msk [vmem:[#allocation8 + $0x8] sm:$0x1f] %vm713, %v706
    // Predicated region
    $region26: #{conv2d_1x1.1} parent=1 // pred_check
      _
    $region27: #{conv2d_1x1.1} parent=1 // pred_check_branch
      %716 = sbr.rel (0) target = $region29
    $region28: #{conv2d_1x1.1} parent=1 // pred_region
      %718 = vsyncadd [#allocation4], 0
      %s720 = sshll.u32 [#allocation8], 4
      %s721 = int_to_ptr.vmem [resolvable:$true] %s720
      %s722 = sshll.u32 %s3, 4
      %s723 = int_to_ptr.hbm [resolvable:$true] %s722
      %725 = dma.vmem_to_hbm [thread:$0]  %s721, 208, %s723, [#allocation4]
    $region29: #{conv2d_1x1.1} parent=1 // pred_fallthru
      _
    // Predicated region
    $region30: #{conv2d_1x1.1} parent=1 // pred_check
      _
    $region31: #{conv2d_1x1.1} parent=1 // pred_check_branch
      %727 = sbr.rel (0) target = $region33
    $region32: #{conv2d_1x1.1} parent=1 // pred_region
      %729 = dma.done [#allocation4], 208
    $region33: #{conv2d_1x1.1} parent=1 // pred_fallthru
      _
    %730 = vsyncpa [#allocation3], 1
    %731 = vsyncpa [#allocation6], 1
    %732 = vsyncpa [#allocation4], 1

</llo_original>
